<compile_context>
chip_gen: v5e
topology: v5e:2x2
jax: 0.10.0
libtpu: 0.0.40
codegen_flags: <defaults>
</compile_context>

<pallas_src>
import jax
import jax.numpy as jnp
from jax.experimental import pallas as pl
from jax.experimental.pallas import tpu as pltpu


def _copy_kernel(x_ref, o_ref):
    # Pure tile copy: one dense (TB, TD) VMEM block in -> same block out.
    o_ref[...] = x_ref[...]


def _choose_tiles(B, D, itemsize):
    """Pick a dense (TB, TD) tile over the flat (B, D) view.

    * Byte budget first (~2 MiB per tile => ~8 MiB double-buffered in+out,
      safe under every TPU generation's scoped-VMEM default).
    * TB: full B when B is small, else a multiple of the dtype packing factor
      (f32 -> 8, bf16 -> 16, int8/fp8 -> 32) for unmasked sublane access.
    * TD: a multiple of 128 lanes whenever D allows, grown to fill the
      remaining budget (important when TB is forced small by a tiny batch);
      ragged (non-128) D keeps a 128-multiple tile and lets the cdiv grid
      handle the tail block instead of setting TD = D.
    """
    target_bytes = 2 * 1024 * 1024
    budget_elems = max(128, target_bytes // itemsize)
    pack = 8 * max(1, 4 // itemsize)  # sublane packing factor per dtype

    # Sublane (second-minor) tile.
    if B <= pack:
        TB = B  # full extent: always legal
    else:
        tb_cap = max(pack, ((budget_elems // 128) // pack) * pack)
        TB = min((B // pack) * pack, tb_cap)

    # Lane (minor) tile: fill the remaining budget with 128-lane multiples.
    td_cap = max(128, ((budget_elems // max(TB, 1)) // 128) * 128)
    if D <= 128 or D <= td_cap:
        TD = D                      # whole row per tile (full extent: legal)
    elif D % 128 == 0:
        TD = min(D, td_cap)         # unmasked 128-multiple tile
    else:
        TD = td_cap                 # 128-multiple tile; cdiv grid pads the tail
    return TB, TD


def _flatten_impl(x: jax.Array) -> jax.Array:
    """Pallas equivalent of `input_tensor.view(input_tensor.size(0), -1)`."""
    B = x.shape[0]
    D = 1
    for s in x.shape[1:]:
        D *= s

    # Metadata-only row-major flatten (same element order as torch .view on a
    # contiguous tensor); the kernel only moves already-flat (B, D) tiles.
    x2 = x.reshape(B, D)
    if B == 0 or D == 0:
        return x2  # degenerate: nothing to copy

    itemsize = jnp.dtype(x.dtype).itemsize
    TB, TD = _choose_tiles(B, D, itemsize)
    grid = (pl.cdiv(B, TB), pl.cdiv(D, TD))

    return pl.pallas_call(
        _copy_kernel,
        out_shape=jax.ShapeDtypeStruct((B, D), x.dtype),
        grid=grid,
        in_specs=[pl.BlockSpec((TB, TD), lambda i, j: (i, j))],
        out_specs=pl.BlockSpec((TB, TD), lambda i, j: (i, j)),
        cost_estimate=pl.CostEstimate(
            flops=0,
            transcendentals=0,
            bytes_accessed=2 * B * D * itemsize,
        ),
        compiler_params=pltpu.CompilerParams(
            dimension_semantics=("parallel", "parallel"),
        ),
    )(x2)


flatten = jax.jit(_flatten_impl)


if __name__ == "__main__":
    key = jax.random.PRNGKey(0)
    B, C, H, W = 2, 4, 16, 16
    x = jax.random.normal(key, (B, C, H, W), dtype=jnp.float32)

    out = flatten(x)
    out = jax.block_until_ready(out)

    # Reference: torch x.view(B, -1) on a contiguous tensor == row-major reshape.
    ref = jnp.reshape(x, (B, C * H * W))

    assert out.shape == (B, C * H * W), out.shape
    assert out.dtype == x.dtype, out.dtype
    assert jnp.array_equal(out, ref), "Pallas flatten mismatch vs reference"

    print("KERNEL_OK")
</pallas_src>

<mosaic_0001>
module attributes {stable_mosaic.version = 11 : i64} {
  func.func @_copy_kernel(%arg0: i32, %arg1: i32, %arg2: memref<2x1024xf32, #tpu.memory_space<vmem>>, %arg3: memref<2x1024xf32, #tpu.memory_space<vmem>>) attributes {dimension_semantics = [#tpu.dimension_semantics<parallel>, #tpu.dimension_semantics<parallel>], iteration_bounds = array<i64: 1, 1>, scalar_prefetch = 0 : i64, scratch_operands = 0 : i64, tpu.core_type = #tpu.core_type<tc>, window_params = [{transform_indices = @transform_0, window_bounds = array<i64: 2, 1024>}, {transform_indices = @transform_1, window_bounds = array<i64: 2, 1024>}]} {
    %c0 = arith.constant 0 : index
    %c0_0 = arith.constant 0 : index
    %0 = vector.load %arg2[%c0, %c0_0] : memref<2x1024xf32, #tpu.memory_space<vmem>>, vector<2x1024xf32>
    %c0_1 = arith.constant 0 : index
    %c0_2 = arith.constant 0 : index
    %1 = vector.load %arg3[%c0_1, %c0_2] : memref<2x1024xf32, #tpu.memory_space<vmem>>, vector<2x1024xf32>
    tpu.vector_store %arg3[%c0_1, %c0_2], %0 {strides = array<i32>} : memref<2x1024xf32, #tpu.memory_space<vmem>>, vector<2x1024xf32>,
    return
  }
  func.func @transform_0(%arg0: i32, %arg1: i32) -> (i32, i32) {
    %c0_i32 = arith.constant 0 : i32
    return %arg0, %arg1 : i32, i32
  }
  func.func @transform_1(%arg0: i32, %arg1: i32) -> (i32, i32) {
    %c0_i32 = arith.constant 0 : i32
    return %arg0, %arg1 : i32, i32
  }
}

</mosaic_0001>

<llo_original>
// kernel: _flatten_impl.1
$region0: #{_flatten_impl.1}
  #allocation0 [shape = 'u32[]', space=smem, size = 0x4, offset = 0x4, fixed_abs, tag = 'smem constant byte address 0x4 - core index']
  #allocation1 [shape = 'u32[72,128]{1,0:T(1,128)}', space=vmem, size = 0x9000, scoped, tag = 'internal scratch']
  %s0 = inlined_call_operand.vmem [shape: f32[2,1024], index: 0, kind: input, shape index: {}]
  %s1 = inlined_call_operand.hbm [shape: f32[2,1024], index: 1, kind: output, shape index: {}]
  %s2 = sld [smem:[#allocation0]]
  $region14: #{_flatten_impl.1} parent=0
    _
  %s4 = ssub.s32 1, %s2
  %s5 = scalar_select 0, %s4, %s2
  $region1: #{_flatten_impl.1} parent=0
    #allocation2 [shape = 'u8[8192]{0}', space=vmem, size = 0x2000, scoped, tag = 'output window, operand 0, single buffered']
    #allocation3 [shape = 's32[1]{0}', space=sflag, size = 0x4, scoped, tag = 'scoped memory for _flatten_impl.1']
    %6 = vsyncpa [#allocation3], 0
    // Predicated region
    $region2: #{_flatten_impl.1} parent=1 // pred_check
      _
    $region3: #{_flatten_impl.1} parent=1 // pred_check_branch
      %8 = sbr.rel (0) target = $region5
    $region4: #{_flatten_impl.1} parent=1 // pred_region
      _
    $region5: #{_flatten_impl.1} parent=1 // pred_fallthru
      _
    %v9 = vld [vmem:[%s0] sm:$0xff]
    %v10 = vld [vmem:[%s0 + $0x8] sm:$0xff]
    %11 = vst [vmem:[#allocation2] sm:$0xff] %v9
    %12 = vst [vmem:[#allocation2 + $0x8] sm:$0xff] %v10
    // Predicated region
    $region6: #{_flatten_impl.1} parent=1 // pred_check
      _
    $region7: #{_flatten_impl.1} parent=1 // pred_check_branch
      %14 = sbr.rel (0) target = $region9
    $region8: #{_flatten_impl.1} parent=1 // pred_region
      %16 = vsyncadd [#allocation3], 0
      %s18 = sshll.u32 [#allocation2], 4
      %s19 = int_to_ptr.vmem [resolvable:$true] %s18
      %s20 = sshll.u32 %s1, 4
      %s21 = int_to_ptr.hbm [resolvable:$true] %s20
      %23 = dma.vmem_to_hbm [thread:$0]  %s19, 256, %s21, [#allocation3]
    $region9: #{_flatten_impl.1} parent=1 // pred_fallthru
      _
    // Predicated region
    $region10: #{_flatten_impl.1} parent=1 // pred_check
      _
    $region11: #{_flatten_impl.1} parent=1 // pred_check_branch
      %25 = sbr.rel (0) target = $region13
    $region12: #{_flatten_impl.1} parent=1 // pred_region
      %27 = dma.done [#allocation3], 256
    $region13: #{_flatten_impl.1} parent=1 // pred_fallthru
      _
    %28 = vsyncpa [#allocation3], 1

</llo_original>
